<compile_context>
chip_gen: v7x
topology: tpu7x:2x2x1
jax: 0.10.0
libtpu: 0.0.40
codegen_flags: <defaults>
</compile_context>

<pallas_src>
import jax
import jax.numpy as jnp
from jax.experimental import pallas as pl
from jax.experimental.pallas import tpu as pltpu

IN_DIM = 8
HIDDEN = 100
HIDDEN_PAD = 128   # lane/sublane-dense hidden width


# ----------------------------------------------------------------------------
# Kernel (transposed orientation: activations are (HIDDEN_PAD, TB))
# ----------------------------------------------------------------------------
def willoh_kernel(xt_ref, w1t_ref, b1_ref, w2t_ref, b2_ref, w3t_ref, b3_ref,
                  w4t_ref, b4_ref, o_ref):
    cd = w2t_ref.dtype  # MXU input dtype (bf16 by default, f32 override)

    # fc1: (128, 8) @ (8, TB) -> (128, TB), f32 accumulate, f32 bias/ReLU.
    h = jnp.dot(w1t_ref[...], xt_ref[...], preferred_element_type=jnp.float32)
    h = jnp.maximum(h + b1_ref[...], 0.0)

    # fc2: (128, 128) @ (128, TB)
    h = jnp.dot(w2t_ref[...], h.astype(cd), preferred_element_type=jnp.float32)
    h = jnp.maximum(h + b2_ref[...], 0.0)

    # fc3: (128, 128) @ (128, TB)
    h = jnp.dot(w3t_ref[...], h.astype(cd), preferred_element_type=jnp.float32)
    h = jnp.maximum(h + b3_ref[...], 0.0)

    # fc4 on the (under-used) MXU: w4 sits in row 0 of an (8, 128) block.
    # (8, 128) @ (128, TB) -> (8, TB); row 0 is the real output.
    y8 = jnp.dot(w4t_ref[...], h.astype(cd), preferred_element_type=jnp.float32)
    o_ref[...] = (y8[0:1, :] + b4_ref[...]).astype(o_ref.dtype)


# ----------------------------------------------------------------------------
# Wrapper
# ----------------------------------------------------------------------------
def _round_up(n, m):
    return ((n + m - 1) // m) * m


def default_mxu_dtype():
    # bf16 MXU inputs everywhere (v5e/v6e/v7x MXUs are bf16-native; f32 matmuls
    # are multi-pass emulation).  All VPU math (bias add / ReLU) stays f32.
    return jnp.bfloat16


def default_batch_tile():
    # Primary tuning knob; large tile amortizes the ~0.35 us per-grid-step
    # overhead.  VMEM use at tb=4096 is ~10-15 MiB -> fine on v7x (64 MiB).
    return 4096


def _prepare_params(params, mxu_dtype):
    """Transpose, zero-pad hidden dims 100 -> 128, cast matmul weights."""
    w1, b1, w2, b2, w3, b3, w4, b4 = params  # w: (in, out), b: (1, out)

    def pad_t(w, rows, cols):
        wt = w.T  # (out, in)
        return jnp.pad(wt, ((0, rows - wt.shape[0]), (0, cols - wt.shape[1])))

    def pad_b(b):
        bt = b.T  # (out, 1)
        return jnp.pad(bt, ((0, HIDDEN_PAD - bt.shape[0]), (0, 0))).astype(jnp.float32)

    w1t = pad_t(w1, HIDDEN_PAD, IN_DIM).astype(mxu_dtype)        # (128, 8)
    w2t = pad_t(w2, HIDDEN_PAD, HIDDEN_PAD).astype(mxu_dtype)    # (128, 128)
    w3t = pad_t(w3, HIDDEN_PAD, HIDDEN_PAD).astype(mxu_dtype)    # (128, 128)
    w4t = pad_t(w4, 8, HIDDEN_PAD).astype(mxu_dtype)             # (8, 128), row 0 = w4
    b1c = pad_b(b1)                                              # (128, 1)
    b2c = pad_b(b2)                                              # (128, 1)
    b3c = pad_b(b3)                                              # (128, 1)
    b4c = b4.reshape(1, 1).astype(jnp.float32)                   # (1, 1)
    return w1t, b1c, w2t, b2c, w3t, b3c, w4t, b4c


def _choose_tile(B, tb_req):
    b128 = _round_up(B, 128)
    tb = _round_up(min(tb_req, b128), 128)
    # If one tile would cover the whole batch but the batch is big enough,
    # split in two so dimension_semantics=("parallel",) can feed both
    # TensorCores on multi-core chips (v7x).
    if b128 <= tb and b128 >= 256:
        tb = _round_up((b128 + 1) // 2, 128)
    b_pad = _round_up(b128, tb)
    return tb, b_pad


def willoh_net(x, params, *, tb=None, mxu_dtype=None, vmem_limit_bytes=None):
    """x: (B, 8) float32 -> (B, 1) float32."""
    if mxu_dtype is None:
        mxu_dtype = default_mxu_dtype()
    if tb is None:
        tb = default_batch_tile()
    if vmem_limit_bytes is None:
        # Generous but safe on v7x's 64 MiB physical VMEM per TensorCore.
        vmem_limit_bytes = 48 * 1024 * 1024

    B, K = x.shape
    assert K == IN_DIM

    w1t, b1c, w2t, b2c, w3t, b3c, w4t, b4c = _prepare_params(params, mxu_dtype)

    tb, b_pad = _choose_tile(B, tb)
    grid = (b_pad // tb,)

    # Batch on the lane axis: x -> (8, B_pad), cast to the MXU dtype.
    xt = x.T.astype(mxu_dtype)
    if b_pad != B:
        xt = jnp.pad(xt, ((0, 0), (0, b_pad - B)))

    res = lambda i: (0, 0)  # VMEM-resident operands (same block every step)

    out = pl.pallas_call(
        willoh_kernel,
        out_shape=jax.ShapeDtypeStruct((1, b_pad), jnp.float32),
        grid=grid,
        in_specs=[
            pl.BlockSpec((IN_DIM, tb), lambda i: (0, i)),        # x^T tile
            pl.BlockSpec((HIDDEN_PAD, IN_DIM), res),             # w1^T
            pl.BlockSpec((HIDDEN_PAD, 1), res),                  # b1
            pl.BlockSpec((HIDDEN_PAD, HIDDEN_PAD), res),         # w2^T
            pl.BlockSpec((HIDDEN_PAD, 1), res),                  # b2
            pl.BlockSpec((HIDDEN_PAD, HIDDEN_PAD), res),         # w3^T
            pl.BlockSpec((HIDDEN_PAD, 1), res),                  # b3
            pl.BlockSpec((8, HIDDEN_PAD), res),                  # w4 (row 0)
            pl.BlockSpec((1, 1), res),                           # b4
        ],
        out_specs=pl.BlockSpec((1, tb), lambda i: (0, i)),       # lane-dense row
        compiler_params=pltpu.CompilerParams(
            dimension_semantics=("parallel",),
            vmem_limit_bytes=vmem_limit_bytes),
    )(xt, w1t, b1c, w2t, b2c, w3t, b3c, w4t, b4c)

    return out[0, :B].reshape(B, 1)


# ----------------------------------------------------------------------------
# Params / test
# ----------------------------------------------------------------------------
def init_params(key):
    """Deterministic init mimicking nn.Linear (uniform +/- 1/sqrt(fan_in)).

    Weights stored as (in_features, out_features) (PyTorch weight.T),
    biases as (1, out_features)."""
    dims = [(IN_DIM, HIDDEN), (HIDDEN, HIDDEN), (HIDDEN, HIDDEN), (HIDDEN, 1)]
    params = []
    for i, (fan_in, fan_out) in enumerate(dims):
        kw, kb = jax.random.split(jax.random.fold_in(key, i))
        bound = 1.0 / jnp.sqrt(jnp.float32(fan_in))
        w = jax.random.uniform(kw, (fan_in, fan_out), jnp.float32, -bound, bound)
        b = jax.random.uniform(kb, (1, fan_out), jnp.float32, -bound, bound)
        params.extend([w, b])
    return tuple(params)


if __name__ == "__main__":
    key = jax.random.PRNGKey(0)
    k_x, k_p = jax.random.split(key)

    batch = 16
    x = jax.random.uniform(k_x, (batch, IN_DIM), jnp.float32, -5.0, 5.0)
    params = init_params(k_p)

    # Plain-JAX f32 reference (matches the PyTorch forward).
    w1, b1, w2, b2, w3, b3, w4, b4 = params
    h = jnp.maximum(x @ w1 + b1, 0.0)
    h = jnp.maximum(h @ w2 + b2, 0.0)
    h = jnp.maximum(h @ w3 + b3, 0.0)
    ref = h @ w4 + b4

    # 1) f32-MXU path: tight numerical check of the kernel structure.
    out_f32 = willoh_net(x, params, mxu_dtype=jnp.float32)
    jax.block_until_ready(out_f32)
    assert out_f32.shape == (batch, 1)
    assert jnp.allclose(out_f32, ref, atol=1e-3, rtol=1e-3), (
        f"f32 path max abs err {jnp.max(jnp.abs(out_f32 - ref))}")

    # 2) bf16-MXU path (default performance path): loose check.
    out_bf16 = willoh_net(x, params)
    jax.block_until_ready(out_bf16)
    assert out_bf16.shape == (batch, 1)
    assert jnp.allclose(out_bf16, ref, atol=5e-2, rtol=5e-2), (
        f"bf16 path max abs err {jnp.max(jnp.abs(out_bf16 - ref))}")

    print("KERNEL_OK")
</pallas_src>

<mosaic_0001>
module attributes {stable_mosaic.version = 11 : i64} {
  func.func @willoh_kernel(%arg0: i32, %arg1: memref<8x128xf32, #tpu.memory_space<vmem>>, %arg2: memref<128x8xf32, #tpu.memory_space<vmem>>, %arg3: memref<128x1xf32, #tpu.memory_space<vmem>>, %arg4: memref<128x128xf32, #tpu.memory_space<vmem>>, %arg5: memref<128x1xf32, #tpu.memory_space<vmem>>, %arg6: memref<128x128xf32, #tpu.memory_space<vmem>>, %arg7: memref<128x1xf32, #tpu.memory_space<vmem>>, %arg8: memref<8x128xf32, #tpu.memory_space<vmem>>, %arg9: memref<1x1xf32, #tpu.memory_space<vmem>>, %arg10: memref<1x128xf32, #tpu.memory_space<vmem>>) attributes {dimension_semantics = [#tpu.dimension_semantics<parallel>], iteration_bounds = array<i64: 1>, scalar_prefetch = 0 : i64, scratch_operands = 0 : i64, tpu.core_type = #tpu.core_type<tc>, window_params = [{transform_indices = @transform_0, window_bounds = array<i64: 8, 128>}, {pipeline_mode = #tpu.pipeline_mode<synchronous>, transform_indices = @transform_1, window_bounds = array<i64: 128, 8>}, {pipeline_mode = #tpu.pipeline_mode<synchronous>, transform_indices = @transform_2, window_bounds = array<i64: 128, 1>}, {pipeline_mode = #tpu.pipeline_mode<synchronous>, transform_indices = @transform_3, window_bounds = array<i64: 128, 128>}, {pipeline_mode = #tpu.pipeline_mode<synchronous>, transform_indices = @transform_4, window_bounds = array<i64: 128, 1>}, {pipeline_mode = #tpu.pipeline_mode<synchronous>, transform_indices = @transform_5, window_bounds = array<i64: 128, 128>}, {pipeline_mode = #tpu.pipeline_mode<synchronous>, transform_indices = @transform_6, window_bounds = array<i64: 128, 1>}, {pipeline_mode = #tpu.pipeline_mode<synchronous>, transform_indices = @transform_7, window_bounds = array<i64: 8, 128>}, {pipeline_mode = #tpu.pipeline_mode<synchronous>, transform_indices = @transform_8, window_bounds = array<i64: 1, 1>}, {transform_indices = @transform_9, window_bounds = array<i64: 1, 128>}]} {
    %c0 = arith.constant 0 : index
    %c0_0 = arith.constant 0 : index
    %0 = vector.load %arg2[%c0, %c0_0] : memref<128x8xf32, #tpu.memory_space<vmem>>, vector<128x8xf32>
    %c0_1 = arith.constant 0 : index
    %c0_2 = arith.constant 0 : index
    %1 = vector.load %arg1[%c0_1, %c0_2] : memref<8x128xf32, #tpu.memory_space<vmem>>, vector<8x128xf32>
    %cst = arith.constant dense<0.000000e+00> : vector<128x128xf32>
    %2 = tpu.matmul %0, %1, %cst {dimension_numbers = #tpu.dot_dimension_numbers<[1], [0], [0], [1], [0, 0, 1, 1], [], []>} : vector<128x8xf32>, vector<8x128xf32>, vector<128x128xf32> -> vector<128x128xf32>
    %c0_3 = arith.constant 0 : index
    %c0_4 = arith.constant 0 : index
    %3 = vector.load %arg3[%c0_3, %c0_4] : memref<128x1xf32, #tpu.memory_space<vmem>>, vector<128x1xf32>
    %4 = vector.broadcast %3 : vector<128x1xf32> to vector<128x128xf32>
    %5 = arith.addf %2, %4 : vector<128x128xf32>
    %cst_5 = arith.constant 0.000000e+00 : f32
    %6 = vector.broadcast %cst_5 : f32 to vector<128x128xf32>
    %7 = arith.maximumf %5, %6 : vector<128x128xf32>
    %c0_6 = arith.constant 0 : index
    %c0_7 = arith.constant 0 : index
    %8 = vector.load %arg4[%c0_6, %c0_7] : memref<128x128xf32, #tpu.memory_space<vmem>>, vector<128x128xf32>
    %cst_8 = arith.constant dense<0.000000e+00> : vector<128x128xf32>
    %9 = tpu.matmul %8, %7, %cst_8 {dimension_numbers = #tpu.dot_dimension_numbers<[1], [0], [0], [1], [0, 0, 1, 1], [], []>} : vector<128x128xf32>, vector<128x128xf32>, vector<128x128xf32> -> vector<128x128xf32>
    %c0_9 = arith.constant 0 : index
    %c0_10 = arith.constant 0 : index
    %10 = vector.load %arg5[%c0_9, %c0_10] : memref<128x1xf32, #tpu.memory_space<vmem>>, vector<128x1xf32>
    %11 = vector.broadcast %10 : vector<128x1xf32> to vector<128x128xf32>
    %12 = arith.addf %9, %11 : vector<128x128xf32>
    %cst_11 = arith.constant 0.000000e+00 : f32
    %13 = vector.broadcast %cst_11 : f32 to vector<128x128xf32>
    %14 = arith.maximumf %12, %13 : vector<128x128xf32>
    %c0_12 = arith.constant 0 : index
    %c0_13 = arith.constant 0 : index
    %15 = vector.load %arg6[%c0_12, %c0_13] : memref<128x128xf32, #tpu.memory_space<vmem>>, vector<128x128xf32>
    %cst_14 = arith.constant dense<0.000000e+00> : vector<128x128xf32>
    %16 = tpu.matmul %15, %14, %cst_14 {dimension_numbers = #tpu.dot_dimension_numbers<[1], [0], [0], [1], [0, 0, 1, 1], [], []>} : vector<128x128xf32>, vector<128x128xf32>, vector<128x128xf32> -> vector<128x128xf32>
    %c0_15 = arith.constant 0 : index
    %c0_16 = arith.constant 0 : index
    %17 = vector.load %arg7[%c0_15, %c0_16] : memref<128x1xf32, #tpu.memory_space<vmem>>, vector<128x1xf32>
    %18 = vector.broadcast %17 : vector<128x1xf32> to vector<128x128xf32>
    %19 = arith.addf %16, %18 : vector<128x128xf32>
    %cst_17 = arith.constant 0.000000e+00 : f32
    %20 = vector.broadcast %cst_17 : f32 to vector<128x128xf32>
    %21 = arith.maximumf %19, %20 : vector<128x128xf32>
    %c0_18 = arith.constant 0 : index
    %c0_19 = arith.constant 0 : index
    %22 = vector.load %arg8[%c0_18, %c0_19] : memref<8x128xf32, #tpu.memory_space<vmem>>, vector<8x128xf32>
    %cst_20 = arith.constant dense<0.000000e+00> : vector<8x128xf32>
    %23 = tpu.matmul %22, %21, %cst_20 {dimension_numbers = #tpu.dot_dimension_numbers<[1], [0], [0], [1], [0, 0, 1, 1], [], []>} : vector<8x128xf32>, vector<128x128xf32>, vector<8x128xf32> -> vector<8x128xf32>
    %24 = vector.extract_strided_slice %23 {offsets = [0, 0], sizes = [1, 128], strides = [1, 1]} : vector<8x128xf32> to vector<1x128xf32>
    %c0_21 = arith.constant 0 : index
    %c0_22 = arith.constant 0 : index
    %25 = vector.load %arg9[%c0_21, %c0_22] : memref<1x1xf32, #tpu.memory_space<vmem>>, vector<1x1xf32>
    %26 = vector.broadcast %25 : vector<1x1xf32> to vector<1x128xf32>
    %27 = arith.addf %24, %26 : vector<1x128xf32>
    %c0_23 = arith.constant 0 : index
    %c0_24 = arith.constant 0 : index
    %28 = vector.load %arg10[%c0_23, %c0_24] : memref<1x128xf32, #tpu.memory_space<vmem>>, vector<1x128xf32>
    tpu.vector_store %arg10[%c0_23, %c0_24], %27 {strides = array<i32>} : memref<1x128xf32, #tpu.memory_space<vmem>>, vector<1x128xf32>,
    return
  }
  func.func @transform_0(%arg0: i32) -> (i32, i32) {
    %c0_i32 = arith.constant 0 : i32
    %c0_i32_0 = arith.constant 0 : i32
    return %c0_i32, %arg0 : i32, i32
  }
  func.func @transform_1(%arg0: i32) -> (i32, i32) {
    %c0_i32 = arith.constant 0 : i32
    %c0_i32_0 = arith.constant 0 : i32
    %c0_i32_1 = arith.constant 0 : i32
    return %c0_i32, %c0_i32_0 : i32, i32
  }
  func.func @transform_2(%arg0: i32) -> (i32, i32) {
    %c0_i32 = arith.constant 0 : i32
    %c0_i32_0 = arith.constant 0 : i32
    %c0_i32_1 = arith.constant 0 : i32
    return %c0_i32, %c0_i32_0 : i32, i32
  }
  func.func @transform_3(%arg0: i32) -> (i32, i32) {
    %c0_i32 = arith.constant 0 : i32
    %c0_i32_0 = arith.constant 0 : i32
    %c0_i32_1 = arith.constant 0 : i32
    return %c0_i32, %c0_i32_0 : i32, i32
  }
  func.func @transform_4(%arg0: i32) -> (i32, i32) {
    %c0_i32 = arith.constant 0 : i32
    %c0_i32_0 = arith.constant 0 : i32
    %c0_i32_1 = arith.constant 0 : i32
    return %c0_i32, %c0_i32_0 : i32, i32
  }
  func.func @transform_5(%arg0: i32) -> (i32, i32) {
    %c0_i32 = arith.constant 0 : i32
    %c0_i32_0 = arith.constant 0 : i32
    %c0_i32_1 = arith.constant 0 : i32
    return %c0_i32, %c0_i32_0 : i32, i32
  }
  func.func @transform_6(%arg0: i32) -> (i32, i32) {
    %c0_i32 = arith.constant 0 : i32
    %c0_i32_0 = arith.constant 0 : i32
    %c0_i32_1 = arith.constant 0 : i32
    return %c0_i32, %c0_i32_0 : i32, i32
  }
  func.func @transform_7(%arg0: i32) -> (i32, i32) {
    %c0_i32 = arith.constant 0 : i32
    %c0_i32_0 = arith.constant 0 : i32
    %c0_i32_1 = arith.constant 0 : i32
    return %c0_i32, %c0_i32_0 : i32, i32
  }
  func.func @transform_8(%arg0: i32) -> (i32, i32) {
    %c0_i32 = arith.constant 0 : i32
    %c0_i32_0 = arith.constant 0 : i32
    %c0_i32_1 = arith.constant 0 : i32
    return %c0_i32, %c0_i32_0 : i32, i32
  }
  func.func @transform_9(%arg0: i32) -> (i32, i32) {
    %c0_i32 = arith.constant 0 : i32
    %c0_i32_0 = arith.constant 0 : i32
    return %c0_i32, %arg0 : i32, i32
  }
}

</mosaic_0001>

<llo_original>
// kernel: tpu_custom_call.1
$region0: #{tpu_custom_call.1}
  #allocation0 [shape = 'u32[]', space=smem, size = 0x4, offset = 0x4, fixed_abs, tag = 'smem constant byte address 0x4 - core index']
  #allocation1 [shape = 'u32[144,128]{1,0:T(1,128)}', space=vmem, size = 0x12000, scoped, tag = 'internal scratch']
  #allocation2 [shape = 'f32[1,1]{1,0:T(1,128)S(1)}', space=vmem, size = 0x200, scoped, tag = 'scoped memory for tpu_custom_call.1']
  %s0 = inlined_call_operand.vmem [shape: f32[8,128], index: 0, kind: input, shape index: {}]
  %s1 = inlined_call_operand.vmem [shape: f32[128,8], index: 1, kind: input, shape index: {}]
  %s2 = inlined_call_operand.vmem [shape: f32[128,1], index: 2, kind: input, shape index: {}]
  %s3 = inlined_call_operand.vmem [shape: f32[128,128], index: 3, kind: input, shape index: {}]
  %s4 = inlined_call_operand.vmem [shape: f32[128,1], index: 4, kind: input, shape index: {}]
  %s5 = inlined_call_operand.vmem [shape: f32[128,128], index: 5, kind: input, shape index: {}]
  %s6 = inlined_call_operand.vmem [shape: f32[128,1], index: 6, kind: input, shape index: {}]
  %s7 = inlined_call_operand.vmem [shape: f32[8,128], index: 7, kind: input, shape index: {}]
  %s8 = inlined_call_operand.<no memory space> [shape: f32[1,1], index: 8, kind: input, shape index: {}]
  %s9 = inlined_call_operand.hbm [shape: f32[1,128], index: 9, kind: output, shape index: {}]
  %s10 = sld [smem:[#allocation0]]
  $region46: #{tpu_custom_call.1} parent=0
    _
  %s12 = ssub.s32 1, %s10
  %s13 = scalar_select 0, %s12, %s10
  %v14 = vstv %s8
  %15 = vst [vmem:[#allocation2] sm:$0x1] %v14
  $region1: #{tpu_custom_call.1} parent=0
    #allocation3 [shape = 'u8[512]{0}', space=vmem, size = 0x400, scoped, tag = 'output window, operand 0, single buffered']
    #allocation4 [shape = 's32[1]{0}', space=sflag, size = 0x4, scoped, tag = 'scoped memory for tpu_custom_call.1']
    %16 = vsyncpa [#allocation4], 0
    // Predicated region
    $region2: #{tpu_custom_call.1} parent=1 // pred_check
      _
    $region3: #{tpu_custom_call.1} parent=1 // pred_check_branch
      %18 = sbr.rel (0) target = $region5
    $region4: #{tpu_custom_call.1} parent=1 // pred_region
      _
    $region5: #{tpu_custom_call.1} parent=1 // pred_fallthru
      _
    // Predicated region
    $region6: #{tpu_custom_call.1} parent=1 // pred_check
      _
    $region7: #{tpu_custom_call.1} parent=1 // pred_check_branch
      %20 = sbr.rel (0) target = $region9
    $region8: #{tpu_custom_call.1} parent=1 // pred_region
      _
    $region9: #{tpu_custom_call.1} parent=1 // pred_fallthru
      _
    // Predicated region
    $region10: #{tpu_custom_call.1} parent=1 // pred_check
      _
    $region11: #{tpu_custom_call.1} parent=1 // pred_check_branch
      %22 = sbr.rel (0) target = $region13
    $region12: #{tpu_custom_call.1} parent=1 // pred_region
      _
    $region13: #{tpu_custom_call.1} parent=1 // pred_fallthru
      _
    // Predicated region
    $region14: #{tpu_custom_call.1} parent=1 // pred_check
      _
    $region15: #{tpu_custom_call.1} parent=1 // pred_check_branch
      %24 = sbr.rel (0) target = $region17
    $region16: #{tpu_custom_call.1} parent=1 // pred_region
      _
    $region17: #{tpu_custom_call.1} parent=1 // pred_fallthru
      _
    // Predicated region
    $region18: #{tpu_custom_call.1} parent=1 // pred_check
      _
    $region19: #{tpu_custom_call.1} parent=1 // pred_check_branch
      %26 = sbr.rel (0) target = $region21
    $region20: #{tpu_custom_call.1} parent=1 // pred_region
      _
    $region21: #{tpu_custom_call.1} parent=1 // pred_fallthru
      _
    // Predicated region
    $region22: #{tpu_custom_call.1} parent=1 // pred_check
      _
    $region23: #{tpu_custom_call.1} parent=1 // pred_check_branch
      %28 = sbr.rel (0) target = $region25
    $region24: #{tpu_custom_call.1} parent=1 // pred_region
      _
    $region25: #{tpu_custom_call.1} parent=1 // pred_fallthru
      _
    // Predicated region
    $region26: #{tpu_custom_call.1} parent=1 // pred_check
      _
    $region27: #{tpu_custom_call.1} parent=1 // pred_check_branch
      %30 = sbr.rel (0) target = $region29
    $region28: #{tpu_custom_call.1} parent=1 // pred_region
      _
    $region29: #{tpu_custom_call.1} parent=1 // pred_fallthru
      _
    // Predicated region
    $region30: #{tpu_custom_call.1} parent=1 // pred_check
      _
    $region31: #{tpu_custom_call.1} parent=1 // pred_check_branch
      %32 = sbr.rel (0) target = $region33
    $region32: #{tpu_custom_call.1} parent=1 // pred_region
      _
    $region33: #{tpu_custom_call.1} parent=1 // pred_fallthru
      _
    // Predicated region
    $region34: #{tpu_custom_call.1} parent=1 // pred_check
      _
    $region35: #{tpu_custom_call.1} parent=1 // pred_check_branch
      %34 = sbr.rel (0) target = $region37
    $region36: #{tpu_custom_call.1} parent=1 // pred_region
      _
    $region37: #{tpu_custom_call.1} parent=1 // pred_fallthru
      _
    %v35 = vld [vmem:[%s1] sm:$0xff]
    %v36 = vld [vmem:[%s1 + $0x8] sm:$0xff]
    %v37 = vld [vmem:[%s1 + $0x10] sm:$0xff]
    %v38 = vld [vmem:[%s1 + $0x18] sm:$0xff]
    %v39 = vld [vmem:[%s1 + $0x20] sm:$0xff]
    %v40 = vld [vmem:[%s1 + $0x28] sm:$0xff]
    %v41 = vld [vmem:[%s1 + $0x30] sm:$0xff]
    %v42 = vld [vmem:[%s1 + $0x38] sm:$0xff]
    %v43 = vld [vmem:[%s1 + $0x40] sm:$0xff]
    %v44 = vld [vmem:[%s1 + $0x48] sm:$0xff]
    %v45 = vld [vmem:[%s1 + $0x50] sm:$0xff]
    %v46 = vld [vmem:[%s1 + $0x58] sm:$0xff]
    %v47 = vld [vmem:[%s1 + $0x60] sm:$0xff]
    %v48 = vld [vmem:[%s1 + $0x68] sm:$0xff]
    %v49 = vld [vmem:[%s1 + $0x70] sm:$0xff]
    %v50 = vld [vmem:[%s1 + $0x78] sm:$0xff]
    %v51 = vld [vmem:[%s0] sm:$0xff]
    %v52 = vld [vmem:[%s2] sm:$0xff]
    %v53 = vld [vmem:[%s2 + $0x8] sm:$0xff]
    %v54 = vld [vmem:[%s2 + $0x10] sm:$0xff]
    %v55 = vld [vmem:[%s2 + $0x18] sm:$0xff]
    %v56 = vld [vmem:[%s2 + $0x20] sm:$0xff]
    %v57 = vld [vmem:[%s2 + $0x28] sm:$0xff]
    %v58 = vld [vmem:[%s2 + $0x30] sm:$0xff]
    %v59 = vld [vmem:[%s2 + $0x38] sm:$0xff]
    %v60 = vld [vmem:[%s2 + $0x40] sm:$0xff]
    %v61 = vld [vmem:[%s2 + $0x48] sm:$0xff]
    %v62 = vld [vmem:[%s2 + $0x50] sm:$0xff]
    %v63 = vld [vmem:[%s2 + $0x58] sm:$0xff]
    %v64 = vld [vmem:[%s2 + $0x60] sm:$0xff]
    %v65 = vld [vmem:[%s2 + $0x68] sm:$0xff]
    %v66 = vld [vmem:[%s2 + $0x70] sm:$0xff]
    %v67 = vld [vmem:[%s2 + $0x78] sm:$0xff]
    %69 = vset.pattern.permute.xlu0 0
    %70 = vperm.xlu0 %69, %v52
    %v71 = vpop.permute.xlu0 %70
    %74 = vset.pattern.permute.xlu0 0
    %75 = vperm.xlu0 %74, %v53
    %v76 = vpop.permute.xlu0 %75
    %79 = vset.pattern.permute.xlu0 0
    %80 = vperm.xlu0 %79, %v54
    %v81 = vpop.permute.xlu0 %80
    %84 = vset.pattern.permute.xlu0 0
    %85 = vperm.xlu0 %84, %v55
    %v86 = vpop.permute.xlu0 %85
    %89 = vset.pattern.permute.xlu0 0
    %90 = vperm.xlu0 %89, %v56
    %v91 = vpop.permute.xlu0 %90
    %94 = vset.pattern.permute.xlu0 0
    %95 = vperm.xlu0 %94, %v57
    %v96 = vpop.permute.xlu0 %95
    %99 = vset.pattern.permute.xlu0 0
    %100 = vperm.xlu0 %99, %v58
    %v101 = vpop.permute.xlu0 %100
    %104 = vset.pattern.permute.xlu0 0
    %105 = vperm.xlu0 %104, %v59
    %v106 = vpop.permute.xlu0 %105
    %109 = vset.pattern.permute.xlu0 0
    %110 = vperm.xlu0 %109, %v60
    %v111 = vpop.permute.xlu0 %110
    %114 = vset.pattern.permute.xlu0 0
    %115 = vperm.xlu0 %114, %v61
    %v116 = vpop.permute.xlu0 %115
    %119 = vset.pattern.permute.xlu0 0
    %120 = vperm.xlu0 %119, %v62
    %v121 = vpop.permute.xlu0 %120
    %124 = vset.pattern.permute.xlu0 0
    %125 = vperm.xlu0 %124, %v63
    %v126 = vpop.permute.xlu0 %125
    %129 = vset.pattern.permute.xlu0 0
    %130 = vperm.xlu0 %129, %v64
    %v131 = vpop.permute.xlu0 %130
    %134 = vset.pattern.permute.xlu0 0
    %135 = vperm.xlu0 %134, %v65
    %v136 = vpop.permute.xlu0 %135
    %139 = vset.pattern.permute.xlu0 0
    %140 = vperm.xlu0 %139, %v66
    %v141 = vpop.permute.xlu0 %140
    %144 = vset.pattern.permute.xlu0 0
    %145 = vperm.xlu0 %144, %v67
    %v146 = vpop.permute.xlu0 %145
    %vm148 = vcmask 64512
    %v150 = vsel %vm148, %v35, 0
    %v153 = vsel %vm148, %v36, 0
    %v156 = vsel %vm148, %v37, 0
    %v159 = vsel %vm148, %v38, 0
    %v162 = vsel %vm148, %v39, 0
    %v165 = vsel %vm148, %v40, 0
    %v168 = vsel %vm148, %v41, 0
    %v171 = vsel %vm148, %v42, 0
    %v174 = vsel %vm148, %v43, 0
    %v177 = vsel %vm148, %v44, 0
    %v180 = vsel %vm148, %v45, 0
    %v183 = vsel %vm148, %v46, 0
    %v186 = vsel %vm148, %v47, 0
    %v189 = vsel %vm148, %v48, 0
    %v192 = vsel %vm148, %v49, 0
    %v195 = vsel %vm148, %v50, 0
    %197 = vmatprep.subr.mxu0 0.0
    %198 = vmatpush1.msra.mxu0 %v51
    %199 = vmatprep.subr.mxu0 0.0
    %200 = vmatpush1.msra.mxu0 0.0
    %201 = vmatprep.subr.mxu0 0.0
    %202 = vmatpush1.msra.mxu0 0.0
    %203 = vmatprep.subr.mxu0 0.0
    %204 = vmatpush1.msra.mxu0 0.0
    %205 = vmatprep.subr.mxu0 0.0
    %206 = vmatpush1.msra.mxu0 0.0
    %207 = vmatprep.subr.mxu0 0.0
    %208 = vmatpush1.msra.mxu0 0.0
    %209 = vmatprep.subr.mxu0 0.0
    %210 = vmatpush1.msra.mxu0 0.0
    %211 = vmatprep.subr.mxu0 0.0
    %212 = vmatpush1.msra.mxu0 0.0
    %213 = vmatprep.subr.mxu0 0.0
    %214 = vmatpush1.msra.mxu0 0.0
    %215 = vmatprep.subr.mxu0 0.0
    %216 = vmatpush1.msra.mxu0 0.0
    %217 = vmatprep.subr.mxu0 0.0
    %218 = vmatpush1.msra.mxu0 0.0
    %219 = vmatprep.subr.mxu0 0.0
    %220 = vmatpush1.msra.mxu0 0.0
    %221 = vmatprep.subr.mxu0 0.0
    %222 = vmatpush1.msra.mxu0 0.0
    %223 = vmatprep.subr.mxu0 0.0
    %224 = vmatpush1.msra.mxu0 0.0
    %225 = vmatprep.subr.mxu0 0.0
    %226 = vmatpush1.msra.mxu0 0.0
    %227 = vmatprep.subr.mxu0 0.0
    %228 = vmatpush1.msra.mxu0 0.0
    %229 = vmatprep.subr.mxu0 0.0
    %230 = vmatpush1.msra.mxu0 0.0
    %231 = vmatprep.subr.mxu0 0.0
    %232 = vmatpush1.msra.mxu0 0.0
    %233 = vmatprep.subr.mxu0 0.0
    %234 = vmatpush1.msra.mxu0 0.0
    %235 = vmatprep.subr.mxu0 0.0
    %236 = vmatpush1.msra.mxu0 0.0
    %237 = vmatprep.subr.mxu0 0.0
    %238 = vmatpush1.msra.mxu0 0.0
    %239 = vmatprep.subr.mxu0 0.0
    %240 = vmatpush1.msra.mxu0 0.0
    %241 = vmatprep.subr.mxu0 0.0
    %242 = vmatpush1.msra.mxu0 0.0
    %243 = vmatprep.subr.mxu0 0.0
    %244 = vmatpush1.msra.mxu0 0.0
    %245 = vmatprep.subr.mxu0 0.0
    %246 = vmatpush1.msra.mxu0 0.0
    %247 = vmatprep.subr.mxu0 0.0
    %248 = vmatpush1.msra.mxu0 0.0
    %249 = vmatprep.subr.mxu0 0.0
    %250 = vmatpush1.msra.mxu0 0.0
    %251 = vmatprep.subr.mxu0 0.0
    %252 = vmatpush1.msra.mxu0 0.0
    %253 = vmatprep.subr.mxu0 0.0
    %254 = vmatpush1.msra.mxu0 0.0
    %255 = vmatprep.subr.mxu0 0.0
    %256 = vmatpush1.msra.mxu0 0.0
    %257 = vmatprep.subr.mxu0 0.0
    %258 = vmatpush1.msra.mxu0 0.0
    %259 = vmatprep.subr.mxu0 0.0
    %260 = vmatpush1.msra.mxu0 0.0
    %261 = vmatprep.mubr.f32.mxu0 0.0
    %262 = vmatmul.mubr.f32.gmra.mrb[0].mxu0 %v150
    %v263 = vpop.f32.mrb[0].mxu0
    %v264 = vadd.f32 %v71, %v263
    %v265 = vpop.f32.mrb[0].mxu0
    %266 = vmatprep.mubr.f32.mxu0 0.0
    %267 = vmatmul.mubr.f32.gmra.mrb[0].mxu0 %v153
    %v268 = vpop.f32.mrb[0].mxu0
    %v269 = vadd.f32 %v76, %v268
    %v270 = vpop.f32.mrb[0].mxu0
    %271 = vmatprep.mubr.f32.mxu0 0.0
    %272 = vmatmul.mubr.f32.gmra.mrb[0].mxu0 %v156
    %v273 = vpop.f32.mrb[0].mxu0
    %v274 = vadd.f32 %v81, %v273
    %v275 = vpop.f32.mrb[0].mxu0
    %276 = vmatprep.mubr.f32.mxu0 0.0
    %277 = vmatmul.mubr.f32.gmra.mrb[0].mxu0 %v159
    %v278 = vpop.f32.mrb[0].mxu0
    %v279 = vadd.f32 %v86, %v278
    %v280 = vpop.f32.mrb[0].mxu0
    %281 = vmatprep.mubr.f32.mxu0 0.0
    %282 = vmatmul.mubr.f32.gmra.mrb[0].mxu0 %v162
    %v283 = vpop.f32.mrb[0].mxu0
    %v284 = vadd.f32 %v91, %v283
    %v285 = vpop.f32.mrb[0].mxu0
    %286 = vmatprep.mubr.f32.mxu0 0.0
    %287 = vmatmul.mubr.f32.gmra.mrb[0].mxu0 %v165
    %v288 = vpop.f32.mrb[0].mxu0
    %v289 = vadd.f32 %v96, %v288
    %v290 = vpop.f32.mrb[0].mxu0
    %291 = vmatprep.mubr.f32.mxu0 0.0
    %292 = vmatmul.mubr.f32.gmra.mrb[0].mxu0 %v168
    %v293 = vpop.f32.mrb[0].mxu0
    %v294 = vadd.f32 %v101, %v293
    %v295 = vpop.f32.mrb[0].mxu0
    %296 = vmatprep.mubr.f32.mxu0 0.0
    %297 = vmatmul.mubr.f32.gmra.mrb[0].mxu0 %v171
    %v298 = vpop.f32.mrb[0].mxu0
    %v299 = vadd.f32 %v106, %v298
    %v300 = vpop.f32.mrb[0].mxu0
    %301 = vmatprep.mubr.f32.mxu0 0.0
    %302 = vmatmul.mubr.f32.gmra.mrb[0].mxu0 %v174
    %v303 = vpop.f32.mrb[0].mxu0
    %v304 = vadd.f32 %v111, %v303
    %v305 = vpop.f32.mrb[0].mxu0
    %306 = vmatprep.mubr.f32.mxu0 0.0
    %307 = vmatmul.mubr.f32.gmra.mrb[0].mxu0 %v177
    %v308 = vpop.f32.mrb[0].mxu0
    %v309 = vadd.f32 %v116, %v308
    %v310 = vpop.f32.mrb[0].mxu0
    %311 = vmatprep.mubr.f32.mxu0 0.0
    %312 = vmatmul.mubr.f32.gmra.mrb[0].mxu0 %v180
    %v313 = vpop.f32.mrb[0].mxu0
    %v314 = vadd.f32 %v121, %v313
    %v315 = vpop.f32.mrb[0].mxu0
    %316 = vmatprep.mubr.f32.mxu0 0.0
    %317 = vmatmul.mubr.f32.gmra.mrb[0].mxu0 %v183
    %v318 = vpop.f32.mrb[0].mxu0
    %v319 = vadd.f32 %v126, %v318
    %v320 = vpop.f32.mrb[0].mxu0
    %321 = vmatprep.mubr.f32.mxu0 0.0
    %322 = vmatmul.mubr.f32.gmra.mrb[0].mxu0 %v186
    %v323 = vpop.f32.mrb[0].mxu0
    %v324 = vadd.f32 %v131, %v323
    %v325 = vpop.f32.mrb[0].mxu0
    %326 = vmatprep.mubr.f32.mxu0 0.0
    %327 = vmatmul.mubr.f32.gmra.mrb[0].mxu0 %v189
    %v328 = vpop.f32.mrb[0].mxu0
    %v329 = vadd.f32 %v136, %v328
    %v330 = vpop.f32.mrb[0].mxu0
    %331 = vmatprep.mubr.f32.mxu0 0.0
    %332 = vmatmul.mubr.f32.gmra.mrb[0].mxu0 %v192
    %v333 = vpop.f32.mrb[0].mxu0
    %v334 = vadd.f32 %v141, %v333
    %v335 = vpop.f32.mrb[0].mxu0
    %336 = vmatprep.mubr.f32.mxu0 0.0
    %337 = vmatmul.mubr.f32.gmra.mrb[0].mxu0 %v195
    %v338 = vpop.f32.mrb[0].mxu0
    %v339 = vadd.f32 %v146, %v338
    %v340 = vpop.f32.mrb[0].mxu0
    %341 = vdwg.mxu0
    %v342 = vmax.f32 %v264, 0.0
    %v343 = vmax.f32 %v269, 0.0
    %v344 = vmax.f32 %v274, 0.0
    %v345 = vmax.f32 %v279, 0.0
    %v346 = vmax.f32 %v284, 0.0
    %v347 = vmax.f32 %v289, 0.0
    %v348 = vmax.f32 %v294, 0.0
    %v349 = vmax.f32 %v299, 0.0
    %v350 = vmax.f32 %v304, 0.0
    %v351 = vmax.f32 %v309, 0.0
    %v352 = vmax.f32 %v314, 0.0
    %v353 = vmax.f32 %v319, 0.0
    %v354 = vmax.f32 %v324, 0.0
    %v355 = vmax.f32 %v329, 0.0
    %v356 = vmax.f32 %v334, 0.0
    %v357 = vmax.f32 %v339, 0.0
    %v358 = vld [vmem:[%s3] sm:$0xff]
    %v359 = vld [vmem:[%s3 + $0x8] sm:$0xff]
    %v360 = vld [vmem:[%s3 + $0x10] sm:$0xff]
    %v361 = vld [vmem:[%s3 + $0x18] sm:$0xff]
    %v362 = vld [vmem:[%s3 + $0x20] sm:$0xff]
    %v363 = vld [vmem:[%s3 + $0x28] sm:$0xff]
    %v364 = vld [vmem:[%s3 + $0x30] sm:$0xff]
    %v365 = vld [vmem:[%s3 + $0x38] sm:$0xff]
    %v366 = vld [vmem:[%s3 + $0x40] sm:$0xff]
    %v367 = vld [vmem:[%s3 + $0x48] sm:$0xff]
    %v368 = vld [vmem:[%s3 + $0x50] sm:$0xff]
    %v369 = vld [vmem:[%s3 + $0x58] sm:$0xff]
    %v370 = vld [vmem:[%s3 + $0x60] sm:$0xff]
    %v371 = vld [vmem:[%s3 + $0x68] sm:$0xff]
    %v372 = vld [vmem:[%s3 + $0x70] sm:$0xff]
    %v373 = vld [vmem:[%s3 + $0x78] sm:$0xff]
    %v374 = vld [vmem:[%s4] sm:$0xff]
    %v375 = vld [vmem:[%s4 + $0x8] sm:$0xff]
    %v376 = vld [vmem:[%s4 + $0x10] sm:$0xff]
    %v377 = vld [vmem:[%s4 + $0x18] sm:$0xff]
    %v378 = vld [vmem:[%s4 + $0x20] sm:$0xff]
    %v379 = vld [vmem:[%s4 + $0x28] sm:$0xff]
    %v380 = vld [vmem:[%s4 + $0x30] sm:$0xff]
    %v381 = vld [vmem:[%s4 + $0x38] sm:$0xff]
    %v382 = vld [vmem:[%s4 + $0x40] sm:$0xff]
    %v383 = vld [vmem:[%s4 + $0x48] sm:$0xff]
    %v384 = vld [vmem:[%s4 + $0x50] sm:$0xff]
    %v385 = vld [vmem:[%s4 + $0x58] sm:$0xff]
    %v386 = vld [vmem:[%s4 + $0x60] sm:$0xff]
    %v387 = vld [vmem:[%s4 + $0x68] sm:$0xff]
    %v388 = vld [vmem:[%s4 + $0x70] sm:$0xff]
    %v389 = vld [vmem:[%s4 + $0x78] sm:$0xff]
    %391 = vset.pattern.permute.xlu0 0
    %392 = vperm.xlu0 %391, %v374
    %v393 = vpop.permute.xlu0 %392
    %396 = vset.pattern.permute.xlu0 0
    %397 = vperm.xlu0 %396, %v375
    %v398 = vpop.permute.xlu0 %397
    %401 = vset.pattern.permute.xlu0 0
    %402 = vperm.xlu0 %401, %v376
    %v403 = vpop.permute.xlu0 %402
    %406 = vset.pattern.permute.xlu0 0
    %407 = vperm.xlu0 %406, %v377
    %v408 = vpop.permute.xlu0 %407
    %411 = vset.pattern.permute.xlu0 0
    %412 = vperm.xlu0 %411, %v378
    %v413 = vpop.permute.xlu0 %412
    %416 = vset.pattern.permute.xlu0 0
    %417 = vperm.xlu0 %416, %v379
    %v418 = vpop.permute.xlu0 %417
    %421 = vset.pattern.permute.xlu0 0
    %422 = vperm.xlu0 %421, %v380
    %v423 = vpop.permute.xlu0 %422
    %426 = vset.pattern.permute.xlu0 0
    %427 = vperm.xlu0 %426, %v381
    %v428 = vpop.permute.xlu0 %427
    %431 = vset.pattern.permute.xlu0 0
    %432 = vperm.xlu0 %431, %v382
    %v433 = vpop.permute.xlu0 %432
    %436 = vset.pattern.permute.xlu0 0
    %437 = vperm.xlu0 %436, %v383
    %v438 = vpop.permute.xlu0 %437
    %441 = vset.pattern.permute.xlu0 0
    %442 = vperm.xlu0 %441, %v384
    %v443 = vpop.permute.xlu0 %442
    %446 = vset.pattern.permute.xlu0 0
    %447 = vperm.xlu0 %446, %v385
    %v448 = vpop.permute.xlu0 %447
    %451 = vset.pattern.permute.xlu0 0
    %452 = vperm.xlu0 %451, %v386
    %v453 = vpop.permute.xlu0 %452
    %456 = vset.pattern.permute.xlu0 0
    %457 = vperm.xlu0 %456, %v387
    %v458 = vpop.permute.xlu0 %457
    %461 = vset.pattern.permute.xlu0 0
    %462 = vperm.xlu0 %461, %v388
    %v463 = vpop.permute.xlu0 %462
    %466 = vset.pattern.permute.xlu0 0
    %467 = vperm.xlu0 %466, %v389
    %v468 = vpop.permute.xlu0 %467
    %470 = vmatprep.subr.mxu0 0.0
    %471 = vmatpush1.msra.mxu0 %v342
    %472 = vmatprep.subr.mxu0 0.0
    %473 = vmatpush1.msra.mxu0 %v343
    %474 = vmatprep.subr.mxu0 0.0
    %475 = vmatpush1.msra.mxu0 %v344
    %476 = vmatprep.subr.mxu0 0.0
    %477 = vmatpush1.msra.mxu0 %v345
    %478 = vmatprep.subr.mxu0 0.0
    %479 = vmatpush1.msra.mxu0 %v346
    %480 = vmatprep.subr.mxu0 0.0
    %481 = vmatpush1.msra.mxu0 %v347
    %482 = vmatprep.subr.mxu0 0.0
    %483 = vmatpush1.msra.mxu0 %v348
    %484 = vmatprep.subr.mxu0 0.0
    %485 = vmatpush1.msra.mxu0 %v349
    %486 = vmatprep.subr.mxu0 0.0
    %487 = vmatpush1.msra.mxu0 %v350
    %488 = vmatprep.subr.mxu0 0.0
    %489 = vmatpush1.msra.mxu0 %v351
    %490 = vmatprep.subr.mxu0 0.0
    %491 = vmatpush1.msra.mxu0 %v352
    %492 = vmatprep.subr.mxu0 0.0
    %493 = vmatpush1.msra.mxu0 %v353
    %494 = vmatprep.subr.mxu0 0.0
    %495 = vmatpush1.msra.mxu0 %v354
    %496 = vmatprep.subr.mxu0 0.0
    %497 = vmatpush1.msra.mxu0 %v355
    %498 = vmatprep.subr.mxu0 0.0
    %499 = vmatpush1.msra.mxu0 %v356
    %500 = vmatprep.subr.mxu0 0.0
    %501 = vmatpush1.msra.mxu0 %v357
    %502 = vmatprep.subr.mxu0 0.0
    %503 = vmatpush1.msra.mxu0 0.0
    %504 = vmatprep.subr.mxu0 0.0
    %505 = vmatpush1.msra.mxu0 0.0
    %506 = vmatprep.subr.mxu0 0.0
    %507 = vmatpush1.msra.mxu0 0.0
    %508 = vmatprep.subr.mxu0 0.0
    %509 = vmatpush1.msra.mxu0 0.0
    %510 = vmatprep.subr.mxu0 0.0
    %511 = vmatpush1.msra.mxu0 0.0
    %512 = vmatprep.subr.mxu0 0.0
    %513 = vmatpush1.msra.mxu0 0.0
    %514 = vmatprep.subr.mxu0 0.0
    %515 = vmatpush1.msra.mxu0 0.0
    %516 = vmatprep.subr.mxu0 0.0
    %517 = vmatpush1.msra.mxu0 0.0
    %518 = vmatprep.subr.mxu0 0.0
    %519 = vmatpush1.msra.mxu0 0.0
    %520 = vmatprep.subr.mxu0 0.0
    %521 = vmatpush1.msra.mxu0 0.0
    %522 = vmatprep.subr.mxu0 0.0
    %523 = vmatpush1.msra.mxu0 0.0
    %524 = vmatprep.subr.mxu0 0.0
    %525 = vmatpush1.msra.mxu0 0.0
    %526 = vmatprep.subr.mxu0 0.0
    %527 = vmatpush1.msra.mxu0 0.0
    %528 = vmatprep.subr.mxu0 0.0
    %529 = vmatpush1.msra.mxu0 0.0
    %530 = vmatprep.subr.mxu0 0.0
    %531 = vmatpush1.msra.mxu0 0.0
    %532 = vmatprep.subr.mxu0 0.0
    %533 = vmatpush1.msra.mxu0 0.0
    %534 = vmatprep.mubr.f32.mxu0 0.0
    %535 = vmatmul.mubr.f32.gmra.mrb[0].mxu0 %v358
    %v536 = vpop.f32.mrb[0].mxu0
    %v537 = vadd.f32 %v393, %v536
    %v538 = vpop.f32.mrb[0].mxu0
    %539 = vmatprep.mubr.f32.mxu0 0.0
    %540 = vmatmul.mubr.f32.gmra.mrb[0].mxu0 %v359
    %v541 = vpop.f32.mrb[0].mxu0
    %v542 = vadd.f32 %v398, %v541
    %v543 = vpop.f32.mrb[0].mxu0
    %544 = vmatprep.mubr.f32.mxu0 0.0
    %545 = vmatmul.mubr.f32.gmra.mrb[0].mxu0 %v360
    %v546 = vpop.f32.mrb[0].mxu0
    %v547 = vadd.f32 %v403, %v546
    %v548 = vpop.f32.mrb[0].mxu0
    %549 = vmatprep.mubr.f32.mxu0 0.0
    %550 = vmatmul.mubr.f32.gmra.mrb[0].mxu0 %v361
    %v551 = vpop.f32.mrb[0].mxu0
    %v552 = vadd.f32 %v408, %v551
    %v553 = vpop.f32.mrb[0].mxu0
    %554 = vmatprep.mubr.f32.mxu0 0.0
    %555 = vmatmul.mubr.f32.gmra.mrb[0].mxu0 %v362
    %v556 = vpop.f32.mrb[0].mxu0
    %v557 = vadd.f32 %v413, %v556
    %v558 = vpop.f32.mrb[0].mxu0
    %559 = vmatprep.mubr.f32.mxu0 0.0
    %560 = vmatmul.mubr.f32.gmra.mrb[0].mxu0 %v363
    %v561 = vpop.f32.mrb[0].mxu0
    %v562 = vadd.f32 %v418, %v561
    %v563 = vpop.f32.mrb[0].mxu0
    %564 = vmatprep.mubr.f32.mxu0 0.0
    %565 = vmatmul.mubr.f32.gmra.mrb[0].mxu0 %v364
    %v566 = vpop.f32.mrb[0].mxu0
    %v567 = vadd.f32 %v423, %v566
    %v568 = vpop.f32.mrb[0].mxu0
    %569 = vmatprep.mubr.f32.mxu0 0.0
    %570 = vmatmul.mubr.f32.gmra.mrb[0].mxu0 %v365
    %v571 = vpop.f32.mrb[0].mxu0
    %v572 = vadd.f32 %v428, %v571
    %v573 = vpop.f32.mrb[0].mxu0
    %574 = vmatprep.mubr.f32.mxu0 0.0
    %575 = vmatmul.mubr.f32.gmra.mrb[0].mxu0 %v366
    %v576 = vpop.f32.mrb[0].mxu0
    %v577 = vadd.f32 %v433, %v576
    %v578 = vpop.f32.mrb[0].mxu0
    %579 = vmatprep.mubr.f32.mxu0 0.0
    %580 = vmatmul.mubr.f32.gmra.mrb[0].mxu0 %v367
    %v581 = vpop.f32.mrb[0].mxu0
    %v582 = vadd.f32 %v438, %v581
    %v583 = vpop.f32.mrb[0].mxu0
    %584 = vmatprep.mubr.f32.mxu0 0.0
    %585 = vmatmul.mubr.f32.gmra.mrb[0].mxu0 %v368
    %v586 = vpop.f32.mrb[0].mxu0
    %v587 = vadd.f32 %v443, %v586
    %v588 = vpop.f32.mrb[0].mxu0
    %589 = vmatprep.mubr.f32.mxu0 0.0
    %590 = vmatmul.mubr.f32.gmra.mrb[0].mxu0 %v369
    %v591 = vpop.f32.mrb[0].mxu0
    %v592 = vadd.f32 %v448, %v591
    %v593 = vpop.f32.mrb[0].mxu0
    %594 = vmatprep.mubr.f32.mxu0 0.0
    %595 = vmatmul.mubr.f32.gmra.mrb[0].mxu0 %v370
    %v596 = vpop.f32.mrb[0].mxu0
    %v597 = vadd.f32 %v453, %v596
    %v598 = vpop.f32.mrb[0].mxu0
    %599 = vmatprep.mubr.f32.mxu0 0.0
    %600 = vmatmul.mubr.f32.gmra.mrb[0].mxu0 %v371
    %v601 = vpop.f32.mrb[0].mxu0
    %v602 = vadd.f32 %v458, %v601
    %v603 = vpop.f32.mrb[0].mxu0
    %604 = vmatprep.mubr.f32.mxu0 0.0
    %605 = vmatmul.mubr.f32.gmra.mrb[0].mxu0 %v372
    %v606 = vpop.f32.mrb[0].mxu0
    %v607 = vadd.f32 %v463, %v606
    %v608 = vpop.f32.mrb[0].mxu0
    %609 = vmatprep.mubr.f32.mxu0 0.0
    %610 = vmatmul.mubr.f32.gmra.mrb[0].mxu0 %v373
    %v611 = vpop.f32.mrb[0].mxu0
    %v612 = vadd.f32 %v468, %v611
    %v613 = vpop.f32.mrb[0].mxu0
    %614 = vdwg.mxu0
    %v615 = vmax.f32 %v537, 0.0
    %v616 = vmax.f32 %v542, 0.0
    %v617 = vmax.f32 %v547, 0.0
    %v618 = vmax.f32 %v552, 0.0
    %v619 = vmax.f32 %v557, 0.0
    %v620 = vmax.f32 %v562, 0.0
    %v621 = vmax.f32 %v567, 0.0
    %v622 = vmax.f32 %v572, 0.0
    %v623 = vmax.f32 %v577, 0.0
    %v624 = vmax.f32 %v582, 0.0
    %v625 = vmax.f32 %v587, 0.0
    %v626 = vmax.f32 %v592, 0.0
    %v627 = vmax.f32 %v597, 0.0
    %v628 = vmax.f32 %v602, 0.0
    %v629 = vmax.f32 %v607, 0.0
    %v630 = vmax.f32 %v612, 0.0
    %v631 = vld [vmem:[%s5] sm:$0xff]
    %v632 = vld [vmem:[%s5 + $0x8] sm:$0xff]
    %v633 = vld [vmem:[%s5 + $0x10] sm:$0xff]
    %v634 = vld [vmem:[%s5 + $0x18] sm:$0xff]
    %v635 = vld [vmem:[%s5 + $0x20] sm:$0xff]
    %v636 = vld [vmem:[%s5 + $0x28] sm:$0xff]
    %v637 = vld [vmem:[%s5 + $0x30] sm:$0xff]
    %v638 = vld [vmem:[%s5 + $0x38] sm:$0xff]
    %v639 = vld [vmem:[%s5 + $0x40] sm:$0xff]
    %v640 = vld [vmem:[%s5 + $0x48] sm:$0xff]
    %v641 = vld [vmem:[%s5 + $0x50] sm:$0xff]
    %v642 = vld [vmem:[%s5 + $0x58] sm:$0xff]
    %v643 = vld [vmem:[%s5 + $0x60] sm:$0xff]
    %v644 = vld [vmem:[%s5 + $0x68] sm:$0xff]
    %v645 = vld [vmem:[%s5 + $0x70] sm:$0xff]
    %v646 = vld [vmem:[%s5 + $0x78] sm:$0xff]
    %v647 = vld [vmem:[%s6] sm:$0xff]
    %v648 = vld [vmem:[%s6 + $0x8] sm:$0xff]
    %v649 = vld [vmem:[%s6 + $0x10] sm:$0xff]
    %v650 = vld [vmem:[%s6 + $0x18] sm:$0xff]
    %v651 = vld [vmem:[%s6 + $0x20] sm:$0xff]
    %v652 = vld [vmem:[%s6 + $0x28] sm:$0xff]
    %v653 = vld [vmem:[%s6 + $0x30] sm:$0xff]
    %v654 = vld [vmem:[%s6 + $0x38] sm:$0xff]
    %v655 = vld [vmem:[%s6 + $0x40] sm:$0xff]
    %v656 = vld [vmem:[%s6 + $0x48] sm:$0xff]
    %v657 = vld [vmem:[%s6 + $0x50] sm:$0xff]
    %v658 = vld [vmem:[%s6 + $0x58] sm:$0xff]
    %v659 = vld [vmem:[%s6 + $0x60] sm:$0xff]
    %v660 = vld [vmem:[%s6 + $0x68] sm:$0xff]
    %v661 = vld [vmem:[%s6 + $0x70] sm:$0xff]
    %v662 = vld [vmem:[%s6 + $0x78] sm:$0xff]
    %664 = vset.pattern.permute.xlu0 0
    %665 = vperm.xlu0 %664, %v647
    %v666 = vpop.permute.xlu0 %665
    %669 = vset.pattern.permute.xlu0 0
    %670 = vperm.xlu0 %669, %v648
    %v671 = vpop.permute.xlu0 %670
    %674 = vset.pattern.permute.xlu0 0
    %675 = vperm.xlu0 %674, %v649
    %v676 = vpop.permute.xlu0 %675
    %679 = vset.pattern.permute.xlu0 0
    %680 = vperm.xlu0 %679, %v650
    %v681 = vpop.permute.xlu0 %680
    %684 = vset.pattern.permute.xlu0 0
    %685 = vperm.xlu0 %684, %v651
    %v686 = vpop.permute.xlu0 %685
    %689 = vset.pattern.permute.xlu0 0
    %690 = vperm.xlu0 %689, %v652
    %v691 = vpop.permute.xlu0 %690
    %694 = vset.pattern.permute.xlu0 0
    %695 = vperm.xlu0 %694, %v653
    %v696 = vpop.permute.xlu0 %695
    %699 = vset.pattern.permute.xlu0 0
    %700 = vperm.xlu0 %699, %v654
    %v701 = vpop.permute.xlu0 %700
    %704 = vset.pattern.permute.xlu0 0
    %705 = vperm.xlu0 %704, %v655
    %v706 = vpop.permute.xlu0 %705
    %709 = vset.pattern.permute.xlu0 0
    %710 = vperm.xlu0 %709, %v656
    %v711 = vpop.permute.xlu0 %710
    %714 = vset.pattern.permute.xlu0 0
    %715 = vperm.xlu0 %714, %v657
    %v716 = vpop.permute.xlu0 %715
    %719 = vset.pattern.permute.xlu0 0
    %720 = vperm.xlu0 %719, %v658
    %v721 = vpop.permute.xlu0 %720
    %724 = vset.pattern.permute.xlu0 0
    %725 = vperm.xlu0 %724, %v659
    %v726 = vpop.permute.xlu0 %725
    %729 = vset.pattern.permute.xlu0 0
    %730 = vperm.xlu0 %729, %v660
    %v731 = vpop.permute.xlu0 %730
    %734 = vset.pattern.permute.xlu0 0
    %735 = vperm.xlu0 %734, %v661
    %v736 = vpop.permute.xlu0 %735
    %739 = vset.pattern.permute.xlu0 0
    %740 = vperm.xlu0 %739, %v662
    %v741 = vpop.permute.xlu0 %740
    %743 = vmatprep.subr.mxu0 0.0
    %744 = vmatpush1.msra.mxu0 %v615
    %745 = vmatprep.subr.mxu0 0.0
    %746 = vmatpush1.msra.mxu0 %v616
    %747 = vmatprep.subr.mxu0 0.0
    %748 = vmatpush1.msra.mxu0 %v617
    %749 = vmatprep.subr.mxu0 0.0
    %750 = vmatpush1.msra.mxu0 %v618
    %751 = vmatprep.subr.mxu0 0.0
    %752 = vmatpush1.msra.mxu0 %v619
    %753 = vmatprep.subr.mxu0 0.0
    %754 = vmatpush1.msra.mxu0 %v620
    %755 = vmatprep.subr.mxu0 0.0
    %756 = vmatpush1.msra.mxu0 %v621
    %757 = vmatprep.subr.mxu0 0.0
    %758 = vmatpush1.msra.mxu0 %v622
    %759 = vmatprep.subr.mxu0 0.0
    %760 = vmatpush1.msra.mxu0 %v623
    %761 = vmatprep.subr.mxu0 0.0
    %762 = vmatpush1.msra.mxu0 %v624
    %763 = vmatprep.subr.mxu0 0.0
    %764 = vmatpush1.msra.mxu0 %v625
    %765 = vmatprep.subr.mxu0 0.0
    %766 = vmatpush1.msra.mxu0 %v626
    %767 = vmatprep.subr.mxu0 0.0
    %768 = vmatpush1.msra.mxu0 %v627
    %769 = vmatprep.subr.mxu0 0.0
    %770 = vmatpush1.msra.mxu0 %v628
    %771 = vmatprep.subr.mxu0 0.0
    %772 = vmatpush1.msra.mxu0 %v629
    %773 = vmatprep.subr.mxu0 0.0
    %774 = vmatpush1.msra.mxu0 %v630
    %775 = vmatprep.subr.mxu0 0.0
    %776 = vmatpush1.msra.mxu0 0.0
    %777 = vmatprep.subr.mxu0 0.0
    %778 = vmatpush1.msra.mxu0 0.0
    %779 = vmatprep.subr.mxu0 0.0
    %780 = vmatpush1.msra.mxu0 0.0
    %781 = vmatprep.subr.mxu0 0.0
    %782 = vmatpush1.msra.mxu0 0.0
    %783 = vmatprep.subr.mxu0 0.0
    %784 = vmatpush1.msra.mxu0 0.0
    %785 = vmatprep.subr.mxu0 0.0
    %786 = vmatpush1.msra.mxu0 0.0
    %787 = vmatprep.subr.mxu0 0.0
    %788 = vmatpush1.msra.mxu0 0.0
    %789 = vmatprep.subr.mxu0 0.0
    %790 = vmatpush1.msra.mxu0 0.0
    %791 = vmatprep.subr.mxu0 0.0
    %792 = vmatpush1.msra.mxu0 0.0
    %793 = vmatprep.subr.mxu0 0.0
    %794 = vmatpush1.msra.mxu0 0.0
    %795 = vmatprep.subr.mxu0 0.0
    %796 = vmatpush1.msra.mxu0 0.0
    %797 = vmatprep.subr.mxu0 0.0
    %798 = vmatpush1.msra.mxu0 0.0
    %799 = vmatprep.subr.mxu0 0.0
    %800 = vmatpush1.msra.mxu0 0.0
    %801 = vmatprep.subr.mxu0 0.0
    %802 = vmatpush1.msra.mxu0 0.0
    %803 = vmatprep.subr.mxu0 0.0
    %804 = vmatpush1.msra.mxu0 0.0
    %805 = vmatprep.subr.mxu0 0.0
    %806 = vmatpush1.msra.mxu0 0.0
    %807 = vmatprep.mubr.f32.mxu0 0.0
    %808 = vmatmul.mubr.f32.gmra.mrb[0].mxu0 %v631
    %v809 = vpop.f32.mrb[0].mxu0
    %v810 = vadd.f32 %v666, %v809
    %v811 = vpop.f32.mrb[0].mxu0
    %812 = vmatprep.mubr.f32.mxu0 0.0
    %813 = vmatmul.mubr.f32.gmra.mrb[0].mxu0 %v632
    %v814 = vpop.f32.mrb[0].mxu0
    %v815 = vadd.f32 %v671, %v814
    %v816 = vpop.f32.mrb[0].mxu0
    %817 = vmatprep.mubr.f32.mxu0 0.0
    %818 = vmatmul.mubr.f32.gmra.mrb[0].mxu0 %v633
    %v819 = vpop.f32.mrb[0].mxu0
    %v820 = vadd.f32 %v676, %v819
    %v821 = vpop.f32.mrb[0].mxu0
    %822 = vmatprep.mubr.f32.mxu0 0.0
    %823 = vmatmul.mubr.f32.gmra.mrb[0].mxu0 %v634
    %v824 = vpop.f32.mrb[0].mxu0
    %v825 = vadd.f32 %v681, %v824
    %v826 = vpop.f32.mrb[0].mxu0
    %827 = vmatprep.mubr.f32.mxu0 0.0
    %828 = vmatmul.mubr.f32.gmra.mrb[0].mxu0 %v635
    %v829 = vpop.f32.mrb[0].mxu0
    %v830 = vadd.f32 %v686, %v829
    %v831 = vpop.f32.mrb[0].mxu0
    %832 = vmatprep.mubr.f32.mxu0 0.0
    %833 = vmatmul.mubr.f32.gmra.mrb[0].mxu0 %v636
    %v834 = vpop.f32.mrb[0].mxu0
    %v835 = vadd.f32 %v691, %v834
    %v836 = vpop.f32.mrb[0].mxu0
    %837 = vmatprep.mubr.f32.mxu0 0.0
    %838 = vmatmul.mubr.f32.gmra.mrb[0].mxu0 %v637
    %v839 = vpop.f32.mrb[0].mxu0
    %v840 = vadd.f32 %v696, %v839
    %v841 = vpop.f32.mrb[0].mxu0
    %842 = vmatprep.mubr.f32.mxu0 0.0
    %843 = vmatmul.mubr.f32.gmra.mrb[0].mxu0 %v638
    %v844 = vpop.f32.mrb[0].mxu0
    %v845 = vadd.f32 %v701, %v844
    %v846 = vpop.f32.mrb[0].mxu0
    %847 = vmatprep.mubr.f32.mxu0 0.0
    %848 = vmatmul.mubr.f32.gmra.mrb[0].mxu0 %v639
    %v849 = vpop.f32.mrb[0].mxu0
    %v850 = vadd.f32 %v706, %v849
    %v851 = vpop.f32.mrb[0].mxu0
    %852 = vmatprep.mubr.f32.mxu0 0.0
    %853 = vmatmul.mubr.f32.gmra.mrb[0].mxu0 %v640
    %v854 = vpop.f32.mrb[0].mxu0
    %v855 = vadd.f32 %v711, %v854
    %v856 = vpop.f32.mrb[0].mxu0
    %857 = vmatprep.mubr.f32.mxu0 0.0
    %858 = vmatmul.mubr.f32.gmra.mrb[0].mxu0 %v641
    %v859 = vpop.f32.mrb[0].mxu0
    %v860 = vadd.f32 %v716, %v859
    %v861 = vpop.f32.mrb[0].mxu0
    %862 = vmatprep.mubr.f32.mxu0 0.0
    %863 = vmatmul.mubr.f32.gmra.mrb[0].mxu0 %v642
    %v864 = vpop.f32.mrb[0].mxu0
    %v865 = vadd.f32 %v721, %v864
    %v866 = vpop.f32.mrb[0].mxu0
    %867 = vmatprep.mubr.f32.mxu0 0.0
    %868 = vmatmul.mubr.f32.gmra.mrb[0].mxu0 %v643
    %v869 = vpop.f32.mrb[0].mxu0
    %v870 = vadd.f32 %v726, %v869
    %v871 = vpop.f32.mrb[0].mxu0
    %872 = vmatprep.mubr.f32.mxu0 0.0
    %873 = vmatmul.mubr.f32.gmra.mrb[0].mxu0 %v644
    %v874 = vpop.f32.mrb[0].mxu0
    %v875 = vadd.f32 %v731, %v874
    %v876 = vpop.f32.mrb[0].mxu0
    %877 = vmatprep.mubr.f32.mxu0 0.0
    %878 = vmatmul.mubr.f32.gmra.mrb[0].mxu0 %v645
    %v879 = vpop.f32.mrb[0].mxu0
    %v880 = vadd.f32 %v736, %v879
    %v881 = vpop.f32.mrb[0].mxu0
    %882 = vmatprep.mubr.f32.mxu0 0.0
    %883 = vmatmul.mubr.f32.gmra.mrb[0].mxu0 %v646
    %v884 = vpop.f32.mrb[0].mxu0
    %v885 = vadd.f32 %v741, %v884
    %v886 = vpop.f32.mrb[0].mxu0
    %887 = vdwg.mxu0
    %v888 = vmax.f32 %v810, 0.0
    %v889 = vmax.f32 %v815, 0.0
    %v890 = vmax.f32 %v820, 0.0
    %v891 = vmax.f32 %v825, 0.0
    %v892 = vmax.f32 %v830, 0.0
    %v893 = vmax.f32 %v835, 0.0
    %v894 = vmax.f32 %v840, 0.0
    %v895 = vmax.f32 %v845, 0.0
    %v896 = vmax.f32 %v850, 0.0
    %v897 = vmax.f32 %v855, 0.0
    %v898 = vmax.f32 %v860, 0.0
    %v899 = vmax.f32 %v865, 0.0
    %v900 = vmax.f32 %v870, 0.0
    %v901 = vmax.f32 %v875, 0.0
    %v902 = vmax.f32 %v880, 0.0
    %v903 = vmax.f32 %v885, 0.0
    %v904 = vld [vmem:[%s7] sm:$0xff]
    %905 = vmatprep.subr.mxu0 0.0
    %906 = vmatpush1.msra.mxu0 %v888
    %907 = vmatprep.subr.mxu0 0.0
    %908 = vmatpush1.msra.mxu0 %v889
    %909 = vmatprep.subr.mxu0 0.0
    %910 = vmatpush1.msra.mxu0 %v890
    %911 = vmatprep.subr.mxu0 0.0
    %912 = vmatpush1.msra.mxu0 %v891
    %913 = vmatprep.subr.mxu0 0.0
    %914 = vmatpush1.msra.mxu0 %v892
    %915 = vmatprep.subr.mxu0 0.0
    %916 = vmatpush1.msra.mxu0 %v893
    %917 = vmatprep.subr.mxu0 0.0
    %918 = vmatpush1.msra.mxu0 %v894
    %919 = vmatprep.subr.mxu0 0.0
    %920 = vmatpush1.msra.mxu0 %v895
    %921 = vmatprep.subr.mxu0 0.0
    %922 = vmatpush1.msra.mxu0 %v896
    %923 = vmatprep.subr.mxu0 0.0
    %924 = vmatpush1.msra.mxu0 %v897
    %925 = vmatprep.subr.mxu0 0.0
    %926 = vmatpush1.msra.mxu0 %v898
    %927 = vmatprep.subr.mxu0 0.0
    %928 = vmatpush1.msra.mxu0 %v899
    %929 = vmatprep.subr.mxu0 0.0
    %930 = vmatpush1.msra.mxu0 %v900
    %931 = vmatprep.subr.mxu0 0.0
    %932 = vmatpush1.msra.mxu0 %v901
    %933 = vmatprep.subr.mxu0 0.0
    %934 = vmatpush1.msra.mxu0 %v902
    %935 = vmatprep.subr.mxu0 0.0
    %936 = vmatpush1.msra.mxu0 %v903
    %937 = vmatprep.subr.mxu0 0.0
    %938 = vmatpush1.msra.mxu0 0.0
    %939 = vmatprep.subr.mxu0 0.0
    %940 = vmatpush1.msra.mxu0 0.0
    %941 = vmatprep.subr.mxu0 0.0
    %942 = vmatpush1.msra.mxu0 0.0
    %943 = vmatprep.subr.mxu0 0.0
    %944 = vmatpush1.msra.mxu0 0.0
    %945 = vmatprep.subr.mxu0 0.0
    %946 = vmatpush1.msra.mxu0 0.0
    %947 = vmatprep.subr.mxu0 0.0
    %948 = vmatpush1.msra.mxu0 0.0
    %949 = vmatprep.subr.mxu0 0.0
    %950 = vmatpush1.msra.mxu0 0.0
    %951 = vmatprep.subr.mxu0 0.0
    %952 = vmatpush1.msra.mxu0 0.0
    %953 = vmatprep.subr.mxu0 0.0
    %954 = vmatpush1.msra.mxu0 0.0
    %955 = vmatprep.subr.mxu0 0.0
    %956 = vmatpush1.msra.mxu0 0.0
    %957 = vmatprep.subr.mxu0 0.0
    %958 = vmatpush1.msra.mxu0 0.0
    %959 = vmatprep.subr.mxu0 0.0
    %960 = vmatpush1.msra.mxu0 0.0
    %961 = vmatprep.subr.mxu0 0.0
    %962 = vmatpush1.msra.mxu0 0.0
    %963 = vmatprep.subr.mxu0 0.0
    %964 = vmatpush1.msra.mxu0 0.0
    %965 = vmatprep.subr.mxu0 0.0
    %966 = vmatpush1.msra.mxu0 0.0
    %967 = vmatprep.subr.mxu0 0.0
    %968 = vmatpush1.msra.mxu0 0.0
    %969 = vmatprep.mubr.f32.mxu0 0.0
    %970 = vmatmul.mubr.f32.gmra.mrb[0].mxu0 %v904
    %v971 = vpop.f32.mrb[0].mxu0
    %v972 = vadd.f32 0.0, %v971
    %v973 = vpop.f32.mrb[0].mxu0
    %974 = vdwg.mxu0
    %v975 = vld [vmem:[#allocation2] sm:$0x1]
    %977 = vset.pattern.permute.xlu0 0
    %978 = vperm.xlu0 %977, %v975
    %v979 = vpop.permute.xlu0 %978
    %v981 = vlaneseq
    %v982 = vshrl.u32 %v981, 7
    %v983 = vsub.s32 0, %v982
    %v984 = vrot.slane %v979, %v983
    %v985 = vadd.f32 %v972, %v984
    %986 = vst [vmem:[#allocation3] sm:$0x1] %v985
    // Predicated region
    $region38: #{tpu_custom_call.1} parent=1 // pred_check
      _
    $region39: #{tpu_custom_call.1} parent=1 // pred_check_branch
      %988 = sbr.rel (0) target = $region41
    $region40: #{tpu_custom_call.1} parent=1 // pred_region
      %s990 = ssub.s32 16, 16
      %991 = vsyncadd [#allocation4], %s990
      %s993 = sshll.u32 [#allocation3], 4
      %s994 = int_to_ptr.vmem [resolvable:$true] %s993
      %996 = dma.vmem_to_hbm [thread:$0]  %s994, 16, %s9, [#allocation4]
    $region41: #{tpu_custom_call.1} parent=1 // pred_fallthru
      _
    // Predicated region
    $region42: #{tpu_custom_call.1} parent=1 // pred_check
      _
    $region43: #{tpu_custom_call.1} parent=1 // pred_check_branch
      %998 = sbr.rel (0) target = $region45
    $region44: #{tpu_custom_call.1} parent=1 // pred_region
      %999 = dma.done [#allocation4], 16
    $region45: #{tpu_custom_call.1} parent=1 // pred_fallthru
      _
    %1000 = vsyncpa [#allocation4], 1

</llo_original>
